<compile_context>
chip_gen: v6e
topology: v6e:2x2x1
jax: 0.10.0
libtpu: 0.0.40
codegen_flags: <defaults>
</compile_context>

<pallas_src>
import jax
import jax.numpy as jnp
from jax.experimental import pallas as pl
from jax.experimental.pallas import tpu as pltpu

_LANES = 128
# Cross-generation compromise (review: v6e could use 8192 w/ bigger vmem limit,
# v7x should stay <= ~4096 because it only has 64 MiB of physical VMEM).
_MAX_BLOCK_ROWS = 4096
_VMEM_LIMIT_BYTES = 40 * 1024 * 1024


def _cdiv(a, b):
    return (a + b - 1) // b


def _round_up(a, m):
    return _cdiv(a, m) * m


def _make_kernel(blk_rows, group_rows, hw, need_mask, tgt_is_bool):
    """Builds the per-(batch, row-chunk) partial-sum kernel.

    Output slab o_ref block (1, 1, 3, 8, 128):
      [...,0,:,:]: sum over pixels of  y_lane   * log_softmax(pred)[lane]
      [...,1,:,:]: sum over pixels of  y_street * log_softmax(pred)[street]
      [...,2,:,:]: sum over pixels of  y_lane   (lane pixel count)
    """
    n_groups = blk_rows // group_rows

    def kernel(x_ref, t_ref, o_ref):
        # x_ref: (1, 2, blk_rows, 128)  pred block (lane, street channels)
        # t_ref: (1, 1, blk_rows, 128)  target block
        if need_mask:
            row0 = pl.program_id(1) * blk_rows
            # Loop-invariant local pixel index within a group (hoisted once).
            local_pix = (
                jax.lax.broadcasted_iota(jnp.int32, (group_rows, _LANES), 0) * _LANES
                + jax.lax.broadcasted_iota(jnp.int32, (group_rows, _LANES), 1))

        def body(g, carry):
            a_lane, a_street, a_cnt = carry
            r0 = pl.multiple_of(g * group_rows, group_rows)

            xl = x_ref[0, 0, pl.ds(r0, group_rows), :].astype(jnp.float32)
            xs = x_ref[0, 1, pl.ds(r0, group_rows), :].astype(jnp.float32)
            tg = t_ref[0, 0, pl.ds(r0, group_rows), :]

            # Numerically stable 2-class log-softmax: one exp + one log / px.
            d = xl - xs
            m = jnp.maximum(xl, xs)
            lse = m + jnp.log(1.0 + jnp.exp(-jnp.abs(d)))
            logp_lane = xl - lse
            logp_street = logp_lane - d

            if tgt_is_bool:
                is_lane = tg
                is_street = jnp.logical_not(tg)
            else:
                # Exact equality test, matching the PyTorch reference; soft /
                # interpolated labels other than exactly 0/1 contribute zero.
                is_lane = tg == 1
                is_street = tg == 0

            if need_mask:
                # Mask pixels past the logical end of the image: covers both
                # the ragged lane tail (H*W % 128 != 0) and garbage rows read
                # by a partial final grid block. Garbage pred values (even
                # NaN) are safe because selection is via jnp.where.
                limit = hw - (row0 + r0) * _LANES
                valid = local_pix < limit
                is_lane = jnp.logical_and(is_lane, valid)
                is_street = jnp.logical_and(is_street, valid)

            a_lane = a_lane + jnp.where(is_lane, logp_lane, 0.0)
            a_street = a_street + jnp.where(is_street, logp_street, 0.0)
            a_cnt = a_cnt + jnp.where(is_lane, 1.0, 0.0)
            return a_lane, a_street, a_cnt

        zeros = jnp.zeros((group_rows, _LANES), jnp.float32)
        a_lane, a_street, a_cnt = jax.lax.fori_loop(
            0, n_groups, body, (zeros, zeros, zeros))

        def fold(a):
            # (G,128) -> (8,128): layout-preserving retiling + plain vreg adds.
            if group_rows == 8:
                return a
            return a.reshape(group_rows // 8, 8, _LANES).sum(axis=0)

        o_ref[0, 0, 0] = fold(a_lane)
        o_ref[0, 0, 1] = fold(a_street)
        o_ref[0, 0, 2] = fold(a_cnt)

    return kernel


def cross_entropy_loss(pred, target, c=1.02):
    """Pallas implementation of the lanenet CrossEntropyLoss forward pass.

    pred:   (N, 2, H, W) logits (lane, street); float32 or bfloat16.
    target: (N, 1, H, W); lane pixels compare equal to 1 and street pixels to
            0 (float {0.,1.}, integer, or bool targets all accepted as-is).
    """
    N, C, H, W = pred.shape
    assert C == 2, "pred must have 2 channels (lane, street)"
    assert target.shape == (N, 1, H, W)

    hw = H * W
    M = N * hw  # == torch.numel(target)

    # Zero-copy reshapes; no per-channel slicing, no dtype widening.
    x = pred.reshape(N, 2, hw)
    t = target.reshape(N, 1, hw)

    hw_pad = _round_up(hw, _LANES)
    if hw_pad != hw:
        # TODO(synk): only hit when H*W % 128 != 0; a 1D-block kernel variant
        # could avoid this extra HBM pass, but the lane-aligned zero-copy
        # reshape below needs a multiple of 128. Pad contents are irrelevant:
        # the in-kernel validity mask zeroes their contribution.
        x = jnp.pad(x, ((0, 0), (0, 0), (0, hw_pad - hw)))
        t = jnp.pad(t, ((0, 0), (0, 0), (0, hw_pad - hw)))

    rows = hw_pad // _LANES
    x = x.reshape(N, 2, rows, _LANES)
    t = t.reshape(N, 1, rows, _LANES)

    # Balanced row chunks: multiple of 8 rows, at most _MAX_BLOCK_ROWS each.
    k_est = _cdiv(rows, _MAX_BLOCK_ROWS)
    blk_rows = _round_up(_cdiv(rows, k_est), 8)
    k_chunks = _cdiv(rows, blk_rows)

    need_mask = (hw_pad != hw) or (k_chunks * blk_rows != rows)

    if blk_rows % 32 == 0:
        group_rows = 32
    elif blk_rows % 16 == 0:
        group_rows = 16
    else:
        group_rows = 8

    kernel = _make_kernel(blk_rows, group_rows, hw, need_mask,
                          target.dtype == jnp.bool_)

    cost = pl.CostEstimate(
        flops=16 * N * rows * _LANES,
        transcendentals=2 * N * rows * _LANES,
        bytes_accessed=int(
            N * rows * _LANES * (2 * pred.dtype.itemsize + target.dtype.itemsize)
            + N * k_chunks * 3 * 8 * _LANES * 4),
    )

    acc = pl.pallas_call(
        kernel,
        out_shape=jax.ShapeDtypeStruct((N, k_chunks, 3, 8, _LANES), jnp.float32),
        grid_spec=pltpu.PrefetchScalarGridSpec(
            num_scalar_prefetch=0,
            grid=(N, k_chunks),
            in_specs=[
                pl.BlockSpec((1, 2, blk_rows, _LANES), lambda n, j: (n, 0, j, 0)),
                pl.BlockSpec((1, 1, blk_rows, _LANES), lambda n, j: (n, 0, j, 0)),
            ],
            out_specs=pl.BlockSpec((1, 1, 3, 8, _LANES),
                                   lambda n, j: (n, j, 0, 0, 0)),
        ),
        compiler_params=pltpu.CompilerParams(
            dimension_semantics=("parallel", "parallel"),
            vmem_limit_bytes=_VMEM_LIMIT_BYTES),
        cost_estimate=cost,
    )(x, t)

    # Scalar glue: finish cross-slab / cross-lane reduction, apply weights.
    sums = jnp.sum(acc, axis=(0, 1, 3, 4))  # (3,)
    sum_lane_logp, sum_street_logp, lane_count = sums[0], sums[1], sums[2]

    prob_lane = lane_count / jnp.float32(M)
    w_lane = 1.0 / jnp.log(jnp.float32(c) + prob_lane)
    w_street = 1.0 / jnp.log(jnp.float32(c) + (1.0 - prob_lane))

    loss = -(w_lane * sum_lane_logp + w_street * sum_street_logp) / jnp.float32(M)
    return loss


def _reference(pred, target, c=1.02):
    """Pure-JAX reference with identical semantics (for validation)."""
    y_lane = (target[:, 0] == 1).astype(jnp.float32)
    y_street = (target[:, 0] == 0).astype(jnp.float32)
    logp = jax.nn.log_softmax(pred.astype(jnp.float32), axis=1)
    prob_lane = jnp.sum(y_lane) / target.size
    w_lane = 1.0 / jnp.log(c + prob_lane)
    w_street = 1.0 / jnp.log(c + 1.0 - prob_lane)
    per_px = -(w_lane * y_lane * logp[:, 0] + w_street * y_street * logp[:, 1])
    return jnp.mean(per_px)


if __name__ == "__main__":
    key = jax.random.PRNGKey(0)
    k1, k2, k3, k4 = jax.random.split(key, 4)

    # Case 1: 16x16 image (H*W = 256, a multiple of 128).
    N, H, W = 2, 16, 16
    pred = jax.random.normal(k1, (N, 2, H, W), dtype=jnp.float32)
    target = (jax.random.uniform(k2, (N, 1, H, W)) < 0.3).astype(jnp.float32)
    loss = cross_entropy_loss(pred, target, c=1.02)
    jax.block_until_ready(loss)
    ref = _reference(pred, target, c=1.02)
    jax.block_until_ready(ref)
    assert jnp.allclose(loss, ref, rtol=1e-5, atol=1e-5), (loss, ref)

    # Case 2: ragged 12x12 image (H*W = 144, not a multiple of 128) to
    # exercise the pad + in-kernel validity-mask path.
    N2, H2, W2 = 2, 12, 12
    pred2 = jax.random.normal(k3, (N2, 2, H2, W2), dtype=jnp.float32)
    target2 = (jax.random.uniform(k4, (N2, 1, H2, W2)) < 0.3).astype(jnp.float32)
    loss2 = cross_entropy_loss(pred2, target2, c=1.02)
    jax.block_until_ready(loss2)
    ref2 = _reference(pred2, target2, c=1.02)
    jax.block_until_ready(ref2)
    assert jnp.allclose(loss2, ref2, rtol=1e-5, atol=1e-5), (loss2, ref2)

    print("KERNEL_OK")
</pallas_src>

<mosaic_0001>
module attributes {stable_mosaic.version = 11 : i64} {
  func.func @kernel(%arg0: i32, %arg1: i32, %arg2: memref<1x2x8x128xf32, #tpu.memory_space<vmem>>, %arg3: memref<1x1x8x128xf32, #tpu.memory_space<vmem>>, %arg4: memref<1x1x3x8x128xf32, #tpu.memory_space<vmem>>) attributes {dimension_semantics = [#tpu.dimension_semantics<parallel>, #tpu.dimension_semantics<parallel>], iteration_bounds = array<i64: 2, 1>, scalar_prefetch = 0 : i64, scratch_operands = 0 : i64, tpu.core_type = #tpu.core_type<tc>, window_params = [{transform_indices = @transform_0, window_bounds = array<i64: 1, 2, 8, 128>}, {transform_indices = @transform_1, window_bounds = array<i64: 1, 1, 8, 128>}, {transform_indices = @transform_2, window_bounds = array<i64: 1, 1, 3, 8, 128>}]} {
    %c8_i32 = arith.constant 8 : i32
    %0 = arith.muli %arg1, %c8_i32 : i32
    %1 = tpu.iota {dimensions = array<i32: 0>} : vector<8x128xi32>
    %c128_i32 = arith.constant 128 : i32
    %2 = vector.broadcast %c128_i32 : i32 to vector<8x128xi32>
    %3 = arith.muli %1, %2 : vector<8x128xi32>
    %4 = tpu.iota {dimensions = array<i32: 1>} : vector<8x128xi32>
    %5 = arith.addi %3, %4 : vector<8x128xi32>
    %cst = arith.constant 0.000000e+00 : f32
    %6 = vector.broadcast %cst : f32 to vector<8x128xf32>
    %c0_i32 = arith.constant 0 : i32
    %c8_i32_0 = arith.constant 8 : i32
    %7 = arith.muli %c0_i32, %c8_i32_0 : i32
    %8 = tpu.assume_multiple %7, 8 : i32
    %c0 = arith.constant 0 : index
    %c0_1 = arith.constant 0 : index
    %9 = arith.index_cast %8 : i32 to index
    %c0_2 = arith.constant 0 : index
    %10 = vector.load %arg2[%c0, %c0_1, %9, %c0_2] : memref<1x2x8x128xf32, #tpu.memory_space<vmem>>, vector<1x1x8x128xf32>
    %11 = vector.shape_cast %10 : vector<1x1x8x128xf32> to vector<8x128xf32>
    %c0_3 = arith.constant 0 : index
    %c1 = arith.constant 1 : index
    %12 = arith.index_cast %8 : i32 to index
    %c0_4 = arith.constant 0 : index
    %13 = vector.load %arg2[%c0_3, %c1, %12, %c0_4] : memref<1x2x8x128xf32, #tpu.memory_space<vmem>>, vector<1x1x8x128xf32>
    %14 = vector.shape_cast %13 : vector<1x1x8x128xf32> to vector<8x128xf32>
    %c0_5 = arith.constant 0 : index
    %c0_6 = arith.constant 0 : index
    %15 = arith.index_cast %8 : i32 to index
    %c0_7 = arith.constant 0 : index
    %16 = vector.load %arg3[%c0_5, %c0_6, %15, %c0_7] : memref<1x1x8x128xf32, #tpu.memory_space<vmem>>, vector<1x1x8x128xf32>
    %17 = vector.shape_cast %16 : vector<1x1x8x128xf32> to vector<8x128xf32>
    %18 = arith.subf %11, %14 : vector<8x128xf32>
    %19 = arith.maximumf %11, %14 : vector<8x128xf32>
    %20 = math.absf %18 : vector<8x128xf32>
    %cst_8 = arith.constant 0.000000e+00 : f32
    %21 = vector.broadcast %cst_8 : f32 to vector<8x128xf32>
    %22 = arith.subf %21, %20 : vector<8x128xf32>
    %23 = math.exp %22 : vector<8x128xf32>
    %cst_9 = arith.constant 1.000000e+00 : f32
    %24 = vector.broadcast %cst_9 : f32 to vector<8x128xf32>
    %25 = arith.addf %24, %23 : vector<8x128xf32>
    %26 = math.log %25 : vector<8x128xf32>
    %27 = arith.addf %19, %26 : vector<8x128xf32>
    %28 = arith.subf %11, %27 : vector<8x128xf32>
    %29 = arith.subf %28, %18 : vector<8x128xf32>
    %cst_10 = arith.constant 1.000000e+00 : f32
    %30 = vector.broadcast %cst_10 : f32 to vector<8x128xf32>
    %31 = arith.cmpf oeq, %17, %30 : vector<8x128xf32>
    %cst_11 = arith.constant 0.000000e+00 : f32
    %32 = vector.broadcast %cst_11 : f32 to vector<8x128xf32>
    %33 = arith.cmpf oeq, %17, %32 : vector<8x128xf32>
    %34 = arith.addi %0, %8 : i32
    %c128_i32_12 = arith.constant 128 : i32
    %35 = arith.muli %34, %c128_i32_12 : i32
    %c256_i32 = arith.constant 256 : i32
    %36 = arith.subi %c256_i32, %35 : i32
    %37 = vector.broadcast %36 : i32 to vector<8x128xi32>
    %38 = arith.cmpi slt, %5, %37 : vector<8x128xi32>
    %39 = arith.andi %31, %38 : vector<8x128xi1>
    %40 = arith.andi %33, %38 : vector<8x128xi1>
    %cst_13 = arith.constant 0.000000e+00 : f32
    %41 = vector.broadcast %cst_13 : f32 to vector<8x128xf32>
    %42 = arith.select %39, %28, %41 : vector<8x128xi1>, vector<8x128xf32>
    %43 = arith.addf %6, %42 : vector<8x128xf32>
    %cst_14 = arith.constant 0.000000e+00 : f32
    %44 = vector.broadcast %cst_14 : f32 to vector<8x128xf32>
    %45 = arith.select %40, %29, %44 : vector<8x128xi1>, vector<8x128xf32>
    %46 = arith.addf %6, %45 : vector<8x128xf32>
    %cst_15 = arith.constant 1.000000e+00 : f32
    %cst_16 = arith.constant 0.000000e+00 : f32
    %47 = vector.broadcast %cst_15 : f32 to vector<8x128xf32>
    %48 = vector.broadcast %cst_16 : f32 to vector<8x128xf32>
    %49 = arith.select %39, %47, %48 : vector<8x128xi1>, vector<8x128xf32>
    %50 = arith.addf %6, %49 : vector<8x128xf32>
    %c1_i32 = arith.constant 1 : i32
    %c0_17 = arith.constant 0 : index
    %c0_18 = arith.constant 0 : index
    %c0_19 = arith.constant 0 : index
    %c0_20 = arith.constant 0 : index
    %c0_21 = arith.constant 0 : index
    %51 = vector.load %arg4[%c0_17, %c0_18, %c0_19, %c0_20, %c0_21] : memref<1x1x3x8x128xf32, #tpu.memory_space<vmem>>, vector<1x1x1x8x128xf32>
    %52 = vector.shape_cast %51 : vector<1x1x1x8x128xf32> to vector<8x128xf32>
    %53 = vector.shape_cast %43 : vector<8x128xf32> to vector<1x1x1x8x128xf32>
    tpu.vector_store %arg4[%c0_17, %c0_18, %c0_19, %c0_20, %c0_21], %53 {strides = array<i32>} : memref<1x1x3x8x128xf32, #tpu.memory_space<vmem>>, vector<1x1x1x8x128xf32>,
    %c0_22 = arith.constant 0 : index
    %c0_23 = arith.constant 0 : index
    %c1_24 = arith.constant 1 : index
    %c0_25 = arith.constant 0 : index
    %c0_26 = arith.constant 0 : index
    %54 = vector.load %arg4[%c0_22, %c0_23, %c1_24, %c0_25, %c0_26] : memref<1x1x3x8x128xf32, #tpu.memory_space<vmem>>, vector<1x1x1x8x128xf32>
    %55 = vector.shape_cast %54 : vector<1x1x1x8x128xf32> to vector<8x128xf32>
    %56 = vector.shape_cast %46 : vector<8x128xf32> to vector<1x1x1x8x128xf32>
    tpu.vector_store %arg4[%c0_22, %c0_23, %c1_24, %c0_25, %c0_26], %56 {strides = array<i32>} : memref<1x1x3x8x128xf32, #tpu.memory_space<vmem>>, vector<1x1x1x8x128xf32>,
    %c0_27 = arith.constant 0 : index
    %c0_28 = arith.constant 0 : index
    %c2 = arith.constant 2 : index
    %c0_29 = arith.constant 0 : index
    %c0_30 = arith.constant 0 : index
    %57 = vector.load %arg4[%c0_27, %c0_28, %c2, %c0_29, %c0_30] : memref<1x1x3x8x128xf32, #tpu.memory_space<vmem>>, vector<1x1x1x8x128xf32>
    %58 = vector.shape_cast %57 : vector<1x1x1x8x128xf32> to vector<8x128xf32>
    %59 = vector.shape_cast %50 : vector<8x128xf32> to vector<1x1x1x8x128xf32>
    tpu.vector_store %arg4[%c0_27, %c0_28, %c2, %c0_29, %c0_30], %59 {strides = array<i32>} : memref<1x1x3x8x128xf32, #tpu.memory_space<vmem>>, vector<1x1x1x8x128xf32>,
    return
  }
  func.func @transform_0(%arg0: i32, %arg1: i32) -> (i32, i32, i32, i32) {
    %c0_i32 = arith.constant 0 : i32
    %c0_i32_0 = arith.constant 0 : i32
    %c0_i32_1 = arith.constant 0 : i32
    return %arg0, %c0_i32, %arg1, %c0_i32_0 : i32, i32, i32, i32
  }
  func.func @transform_1(%arg0: i32, %arg1: i32) -> (i32, i32, i32, i32) {
    %c0_i32 = arith.constant 0 : i32
    %c0_i32_0 = arith.constant 0 : i32
    %c0_i32_1 = arith.constant 0 : i32
    return %arg0, %c0_i32, %arg1, %c0_i32_0 : i32, i32, i32, i32
  }
  func.func @transform_2(%arg0: i32, %arg1: i32) -> (i32, i32, i32, i32, i32) {
    %c0_i32 = arith.constant 0 : i32
    %c0_i32_0 = arith.constant 0 : i32
    %c0_i32_1 = arith.constant 0 : i32
    %c0_i32_2 = arith.constant 0 : i32
    return %arg0, %arg1, %c0_i32, %c0_i32_0, %c0_i32_1 : i32, i32, i32, i32, i32
  }
}

</mosaic_0001>

<llo_original>
// kernel: tpu_custom_call.1
$region0: #{tpu_custom_call.1}
  #allocation0 [shape = 'u32[]', space=smem, size = 0x4, offset = 0x4, fixed_abs, tag = 'smem constant byte address 0x4 - core index']
  #allocation1 [shape = 'u32[144,128]{1,0:T(1,128)}', space=vmem, size = 0x12000, scoped, tag = 'internal scratch']
  #allocation8 [shape = 's32[]', space=sflag, size = 0x4, offset = 0, fixed_abs, tag = 'sflag constant byte address 0x0 - dummy sync flag']
  %s0 = inlined_call_operand.hbm [shape: f32[2,2,2,128], index: 0, kind: input, shape index: {}]
  %s1 = inlined_call_operand.hbm [shape: f32[2,1,2,128], index: 1, kind: input, shape index: {}]
  %s2 = inlined_call_operand.hbm [shape: f32[2,1,3,8,128], index: 2, kind: output, shape index: {}]
  %s3 = sld [smem:[#allocation0]]
  $region49: #{tpu_custom_call.1} parent=0
    _
  %s5 = ssub.s32 1, %s3
  %s6 = scalar_select 0, %s5, %s3
  $region1: #{tpu_custom_call.1} parent=0
    #allocation2 [shape = 'u8[16384]{0}', space=vmem, size = 0x4000, scoped, tag = 'input window, operand 0']
    #allocation3 [shape = 's32[2]{0}', space=sflag, size = 0x8, scoped, tag = 'scoped memory for tpu_custom_call.1']
    #allocation4 [shape = 's32[2]{0}', space=sflag, size = 0x8, scoped, tag = 'scoped memory for tpu_custom_call.1']
    #allocation5 [shape = 'u8[8192]{0}', space=vmem, size = 0x2000, scoped, tag = 'input window, operand 1']
    #allocation6 [shape = 's32[2]{0}', space=sflag, size = 0x8, scoped, tag = 'scoped memory for tpu_custom_call.1']
    #allocation7 [shape = 'u8[24576]{0}', space=vmem, size = 0x6000, scoped, tag = 'output window, operand 0']
    %7 = vsyncpa [#allocation3], 0
    %s8 = scalar_lea.sflag [#allocation3], 1
    %9 = vsyncpa %s8, 0
    %10 = vsyncpa [#allocation6], 0
    %s11 = scalar_lea.sflag [#allocation6], 1
    %12 = vsyncpa %s11, 0
    %13 = vsyncpa [#allocation4], 0
    %s14 = scalar_lea.sflag [#allocation4], 1
    %15 = vsyncpa %s14, 0
    loop: start=0, step=1, limit=4
    $region2: #{tpu_custom_call.1} parent=1 // loop_pre_header
      _
    $region3: #{tpu_custom_call.1} parent=1 // loop_header
      %s17 = sphi 0, %s21
      %p18 = scmp.ge.s32.totalorder %s17, 4
      %s24 = sphi 0, %s36
      %s25 = sphi 0, %s32
      %s26 = sphi 0, %s24
      %s27 = sphi 0, %s25
      %s28 = sphi 0, %s26
      %s29 = sphi 0, %s27
      %s41 = sphi 0, %s43
      %s44 = sphi 0, %s41
      %s45 = sphi 0, %s44
      %s61 = sphi 0, %s45
      %s69 = sphi 0, %s71
      %s72 = sphi 0, %s69
      %s73 = sphi 0, %s72
      %s89 = sphi 0, %s73
      %s97 = sphi 0, %s99
      %s100 = sphi 0, %s97
      %s101 = sphi 0, %s100
      %s117 = sphi 0, %s101
    $region4: #{tpu_custom_call.1} parent=1 // loop_header_branch
      %20 = sbr.rel (%p18) target = $region8
    $region5: #{tpu_custom_call.1} parent=1 // loop_body
      %s22 = ssub.s32 %s17, 1
      %s23 = ssub.s32 %s17, 2
      %s30 = sadd.s32 1, %s25
      %p31 = scmp.ge.s32.totalorder %s30, 1
      %s32 = scalar_select %p31, 0, %s30
      %s33 = sadd.s32 1, %s24
      %s34 = scalar_select %p31, %s33, %s24
      %p35 = scmp.ge.s32.totalorder %s34, 2
      %s36 = scalar_select %p35, 0, %s34
      %s37 = ssub.s32 %s24, %s36
      %s38 = ssub.s32 %s25, %s32
      %s39 = sor.u32 %s37, %s38
      %p40 = scmp.eq.s32.totalorder %s39, 0
      %s42 = sadd.s32 %s41, 1
      %s43 = scalar_select %p40, %s41, %s42
      %p46 = pneg %p40
      %p47 = scmp.eq.s32.totalorder %s17, 1
      %p48 = por %p46, %p47
      %p49 = scmp.ne.s32.totalorder %s41, %s44
      %p50 = scmp.eq.s32.totalorder %s17, 0
      %p51 = por %p49, %p50
      %p52 = scmp.ne.s32.totalorder %s41, %s44
      %p53 = scmp.eq.s32.totalorder %s22, 1
      %p54 = por %p52, %p53
      %p55 = scmp.ne.s32.totalorder %s44, %s45
      %p56 = scmp.eq.s32.totalorder %s22, 0
      %p57 = por %p55, %p56
      %p58 = scmp.ne.s32.totalorder %s44, %s45
      %p59 = scmp.eq.s32.totalorder %s23, 1
      %p60 = por %p58, %p59
      %p62 = scmp.ne.s32.totalorder %s45, %s61
      %p63 = scmp.eq.s32.totalorder %s23, 0
      %p64 = por %p62, %p63
      %s65 = ssub.s32 %s24, %s36
      %s66 = ssub.s32 %s25, %s32
      %s67 = sor.u32 %s65, %s66
      %p68 = scmp.eq.s32.totalorder %s67, 0
      %s70 = sadd.s32 %s69, 1
      %s71 = scalar_select %p68, %s69, %s70
      %p74 = pneg %p68
      %p75 = scmp.eq.s32.totalorder %s17, 1
      %p76 = por %p74, %p75
      %p77 = scmp.ne.s32.totalorder %s69, %s72
      %p78 = scmp.eq.s32.totalorder %s17, 0
      %p79 = por %p77, %p78
      %p80 = scmp.ne.s32.totalorder %s69, %s72
      %p81 = scmp.eq.s32.totalorder %s22, 1
      %p82 = por %p80, %p81
      %p83 = scmp.ne.s32.totalorder %s72, %s73
      %p84 = scmp.eq.s32.totalorder %s22, 0
      %p85 = por %p83, %p84
      %p86 = scmp.ne.s32.totalorder %s72, %s73
      %p87 = scmp.eq.s32.totalorder %s23, 1
      %p88 = por %p86, %p87
      %p90 = scmp.ne.s32.totalorder %s73, %s89
      %p91 = scmp.eq.s32.totalorder %s23, 0
      %p92 = por %p90, %p91
      %s93 = ssub.s32 %s24, %s36
      %s94 = ssub.s32 %s25, %s32
      %s95 = sor.u32 %s93, %s94
      %p96 = scmp.eq.s32.totalorder %s95, 0
      %s98 = sadd.s32 %s97, 1
      %s99 = scalar_select %p96, %s97, %s98
      %p102 = pneg %p96
      %p103 = scmp.eq.s32.totalorder %s17, 1
      %p104 = por %p102, %p103
      %p105 = scmp.ne.s32.totalorder %s97, %s100
      %p106 = scmp.eq.s32.totalorder %s17, 0
      %p107 = por %p105, %p106
      %p108 = scmp.ne.s32.totalorder %s97, %s100
      %p109 = scmp.eq.s32.totalorder %s22, 1
      %p110 = por %p108, %p109
      %p111 = scmp.ne.s32.totalorder %s100, %s101
      %p112 = scmp.eq.s32.totalorder %s22, 0
      %p113 = por %p111, %p112
      %p114 = scmp.ne.s32.totalorder %s100, %s101
      %p115 = scmp.eq.s32.totalorder %s23, 1
      %p116 = por %p114, %p115
      %p118 = scmp.ne.s32.totalorder %s101, %s117
      %p119 = scmp.eq.s32.totalorder %s23, 0
      %p120 = por %p118, %p119
      %p121 = scmp.le.s32.totalorder 1, %s17
      %p122 = scmp.lt.s32.totalorder %s17, 3
      %p123 = pnand %p121, %p122
      %p124 = pneg %p123
      // Predicated region
      $region9: #{tpu_custom_call.1} parent=5 // pred_check
        _
      $region10: #{tpu_custom_call.1} parent=5 // pred_check_branch
        %126 = sbr.rel (%p123) target = $region12
      $region11: #{tpu_custom_call.1} parent=5 // pred_region
        %s127 = ssub.s32 %s17, 1
      $region12: #{tpu_custom_call.1} parent=5 // pred_fallthru
        _
      %p128 = scmp.lt.s32.totalorder %s17, 2
      // Predicated region
      $region13: #{tpu_custom_call.1} parent=5 // pred_check
        %p129 = pneg %p128
      $region14: #{tpu_custom_call.1} parent=5 // pred_check_branch
        %131 = sbr.rel (%p129) target = $region16
      $region15: #{tpu_custom_call.1} parent=5 // pred_region
        // Predicated region
        $region17: #{tpu_custom_call.1} parent=15 // pred_check
          %p132 = pneg %p51
        $region18: #{tpu_custom_call.1} parent=15 // pred_check_branch
          %134 = sbr.rel (%p132) target = $region20
        $region19: #{tpu_custom_call.1} parent=15 // pred_region
          #allocation9 [shape = 'u32[6]{0}', space=smem, size = 0x18, scoped, tag = 'DMA stride descriptor']
          %s135 = sand.u32 %s41, 1
          %s136 = scalar_lea.sflag [#allocation3], %s135
          %s137 = sand.u32 %s41, 1
          %s138 = smul.addr %s137, 16
          %s139 = scalar_lea.vmem [#allocation2], %s138
          %s140 = smul.u32 4, %s25
          %s141 = ssub.s32 1, %s140
          %s142 = smul.u32 64, %s141
          %s144 = ssub.s32 256, %s142
          %145 = vsyncadd %s136, %s144
          %p146 = scmp.ne.s32.totalorder 0, %s142
          %s147 = smul.addr %s24, 2
          %s148 = sadd.s32 %s140, %s147
          %s149 = smul.addr %s148, 32
          %s150 = scalar_lea.hbm %s0, %s149
          %s151 = smul.u32 2, %s141
          %s152 = smul.u32 %s151, 2
          %s154 = sshll.u32 1, 14
          %s155 = sxor.u32 4294967295, %s154
          %s157 = sld [smem:[#allocation0]]
          %s158 = sadd.s32 2, %s157
          %s160 = sshll.u32 7, 26
          %s161 = sxor.u32 4294967295, %s160
          %s162 = sand.u32 0, %s161
          %s163 = sshll.u32 %s158, 26
          %s164 = sor.u32 %s162, %s163
          %s165 = sshll.u32 %s139, 4
          %s166 = int_to_ptr.vmem [resolvable:$true] %s165
          %s167 = sshll.u32 %s152, 4
          %172 = sst [smem:[#allocation9]] 32
          %s173 = scalar_lea.smem [#allocation9], 1
          %174 = sst [smem:[%s173]] 128
          %s175 = scalar_lea.smem [#allocation9], 2
          %176 = sst [smem:[%s175]] %s141
          %s177 = scalar_lea.smem [#allocation9], 3
          %178 = sst [smem:[%s177]] 32
          %s179 = scalar_lea.smem [#allocation9], 4
          %180 = sst [smem:[%s179]] 32
          %s181 = scalar_lea.smem [#allocation9], 5
          %182 = sst [smem:[%s181]] 2
          %184 = dma.general (%p146), %s150, %s167, %s166, %s136, 131072, [#allocation9], %s164, 0
        $region20: #{tpu_custom_call.1} parent=15 // pred_fallthru
          _
        // Predicated region
        $region21: #{tpu_custom_call.1} parent=15 // pred_check
          %p185 = pneg %p79
        $region22: #{tpu_custom_call.1} parent=15 // pred_check_branch
          %187 = sbr.rel (%p185) target = $region24
        $region23: #{tpu_custom_call.1} parent=15 // pred_region
          %s188 = sand.u32 %s69, 1
          %s189 = scalar_lea.sflag [#allocation6], %s188
          %s190 = sand.u32 %s69, 1
          %s191 = smul.addr %s190, 8
          %s192 = scalar_lea.vmem [#allocation5], %s191
          %s193 = smul.u32 4, %s25
          %s194 = ssub.s32 1, %s193
          %s195 = smul.u32 32, %s194
          %s197 = ssub.s32 128, %s195
          %198 = vsyncadd %s189, %s197
          %p199 = scmp.ne.s32.totalorder 0, %s195
          %s200 = sadd.s32 %s193, %s24
          %s201 = smul.addr %s200, 32
          %s202 = scalar_lea.hbm %s1, %s201
          %s203 = smul.u32 2, %s194
          %s204 = sshll.u32 %s192, 4
          %s205 = int_to_ptr.vmem [resolvable:$true] %s204
          %s206 = sshll.u32 %s203, 4
          %210 = dma.hbm_to_vmem [thread:$0]  (%p199), %s202, %s206, %s205, %s189, 32, 32, 2
        $region24: #{tpu_custom_call.1} parent=15 // pred_fallthru
          _
      $region16: #{tpu_custom_call.1} parent=5 // pred_fallthru
        _
      %p211 = scmp.le.s32.totalorder 1, %s17
      %p212 = scmp.lt.s32.totalorder %s17, 3
      %p213 = pnand %p211, %p212
      %p214 = pneg %p213
      // Predicated region
      $region25: #{tpu_custom_call.1} parent=5 // pred_check
        _
      $region26: #{tpu_custom_call.1} parent=5 // pred_check_branch
        %216 = sbr.rel (%p213) target = $region28
      $region27: #{tpu_custom_call.1} parent=5 // pred_region
        %s217 = ssub.s32 %s17, 1
        %s218 = sand.u32 %s44, 1
        %s219 = scalar_lea.sflag [#allocation3], %s218
        %s220 = sand.u32 %s44, 1
        %s221 = smul.addr %s220, 16
        %s222 = scalar_lea.vmem [#allocation2], %s221
        // Predicated region
        $region29: #{tpu_custom_call.1} parent=27 // pred_check
          %p223 = pneg %p57
        $region30: #{tpu_custom_call.1} parent=27 // pred_check_branch
          %225 = sbr.rel (%p223) target = $region32
        $region31: #{tpu_custom_call.1} parent=27 // pred_region
          %226 = dma.done %s219, 256
        $region32: #{tpu_custom_call.1} parent=27 // pred_fallthru
          _
        %s227 = sand.u32 %s72, 1
        %s228 = scalar_lea.sflag [#allocation6], %s227
        %s229 = sand.u32 %s72, 1
        %s230 = smul.addr %s229, 8
        %s231 = scalar_lea.vmem [#allocation5], %s230
        // Predicated region
        $region33: #{tpu_custom_call.1} parent=27 // pred_check
          %p232 = pneg %p85
        $region34: #{tpu_custom_call.1} parent=27 // pred_check_branch
          %234 = sbr.rel (%p232) target = $region36
        $region35: #{tpu_custom_call.1} parent=27 // pred_region
          %235 = dma.done %s228, 128
        $region36: #{tpu_custom_call.1} parent=27 // pred_fallthru
          _
        %s236 = sand.u32 %s44, 1
        %s237 = scalar_lea.sflag [#allocation3], %s236
        %s238 = sand.u32 %s44, 1
        %s239 = smul.addr %s238, 16
        %s240 = scalar_lea.vmem [#allocation2], %s239
        %p241 = pneg %p57
        %p242 = pneg %p54
        %s243 = sand.u32 %s72, 1
        %s244 = scalar_lea.sflag [#allocation6], %s243
        %s245 = sand.u32 %s72, 1
        %s246 = smul.addr %s245, 8
        %s247 = scalar_lea.vmem [#allocation5], %s246
        %p248 = pneg %p85
        %p249 = pneg %p82
        %p250 = pneg %p113
        %p251 = pneg %p110
        %s252 = sand.u32 %s100, 1
        %s253 = scalar_lea.sflag [#allocation4], %s252
        %s254 = sand.u32 %s100, 1
        %s255 = smul.addr %s254, 24
        %s256 = scalar_lea.vmem [#allocation7], %s255
        %s257 = smul.u32 4, %s27
        %s258 = ssub.s32 1, %s257
        %s259 = smul.u32 64, %s258
        %s260 = smul.u32 4, %s27
        %s261 = ssub.s32 1, %s260
        %s262 = smul.u32 32, %s261
        %s263 = smul.u32 %s27, 8
        %v264 = vlaneseq
        %v265 = vshrl.u32 %v264, 7
        %v266 = vmul.u32 %v265, 128
        %v267 = vlaneseq
        %v268 = vand.u32 %v267, 127
        %v269 = vadd.s32 %v266, %v268
        %v270 = vld [vmem:[%s222] sm:$0xff]
        %s271 = sadd.s32 0, 8
        %s272 = scalar_lea.vmem %s222, %s271 [#allocation2]
        %v273 = vld [vmem:[%s272] sm:$0xff]
        %v274 = vld [vmem:[%s231] sm:$0xff]
        %v275 = vsub.f32 %v270, %v273
        %v276 = vmax.f32 %v270, %v273
        %v277 = vand.u32 2147483647, %v275
        %v278 = vsub.f32 0.0, %v277
        %v279 = vmul.f32 %v278, 1.442695
        %v280 = vpow.pop %v279
        %v281 = vadd.f32 %v280, 1.0
        %v282 = vlog2.pop %v281
        %v283 = vmul.f32 %v282, 0.6931472
        %v284 = vadd.f32 %v276, %v283
        %v285 = vsub.f32 %v270, %v284
        %v286 = vsub.f32 %v285, %v275
        %vm287 = vcmp.eq.f32.partialorder %v274, 1.0
        %vm288 = vcmp.eq.f32.partialorder %v274, 0.0
        %s289 = sadd.s32 %s263, 0
        %s290 = smul.u32 %s289, 128
        %s291 = ssub.s32 256, %s290
        %v292 = vstv %s291
        %vm293 = vcmp.lt.s32.totalorder %v269, %v292
        %vm294 = vmand %vm287, %vm293
        %vm295 = vmand %vm288, %vm293
        %v296 = vsel %vm294, %v285, 0.0
        %v297 = vadd.f32 %v296, 0.0
        %v298 = vsel %vm295, %v286, 0.0
        %v299 = vadd.f32 %v298, 0.0
        %v300 = vsel %vm294, 1.0, 0.0
        %v301 = vadd.f32 %v300, 0.0
        %302 = vst [vmem:[%s256] sm:$0xff] %v297
        %s303 = scalar_lea.vmem %s256, 8 [#allocation7]
        %304 = vst [vmem:[%s303] sm:$0xff] %v299
        %s305 = scalar_lea.vmem %s256, 16 [#allocation7]
        %306 = vst [vmem:[%s305] sm:$0xff] %v301
        %s307 = sand.u32 %s100, 1
        %s308 = scalar_lea.sflag [#allocation4], %s307
        %s309 = sand.u32 %s100, 1
        %s310 = smul.addr %s309, 24
        %s311 = scalar_lea.vmem [#allocation7], %s310
        // Predicated region
        $region37: #{tpu_custom_call.1} parent=27 // pred_check
          %p312 = pneg %p110
        $region38: #{tpu_custom_call.1} parent=27 // pred_check_branch
          %314 = sbr.rel (%p312) target = $region40
        $region39: #{tpu_custom_call.1} parent=27 // pred_region
          %s316 = ssub.s32 384, 384
          %317 = vsyncadd %s308, %s316
          %s318 = smul.addr %s27, 3
          %s319 = smul.addr %s26, 3
          %s320 = sadd.s32 %s318, %s319
          %s321 = smul.addr %s320, 128
          %s322 = scalar_lea.hbm %s2, %s321
          %s323 = sshll.u32 %s311, 4
          %s324 = int_to_ptr.vmem [resolvable:$true] %s323
          %329 = dma.vmem_to_hbm [thread:$0]  %s324, 384, %s322, %s308, 128, 128, 8
        $region40: #{tpu_custom_call.1} parent=27 // pred_fallthru
          _
      $region28: #{tpu_custom_call.1} parent=5 // pred_fallthru
        _
      %p330 = scmp.le.s32.totalorder 2, %s17
      // Predicated region
      $region41: #{tpu_custom_call.1} parent=5 // pred_check
        %p331 = pneg %p330
      $region42: #{tpu_custom_call.1} parent=5 // pred_check_branch
        %333 = sbr.rel (%p331) target = $region44
      $region43: #{tpu_custom_call.1} parent=5 // pred_region
        %s334 = ssub.s32 %s17, 2
        // Predicated region
        $region45: #{tpu_custom_call.1} parent=43 // pred_check
          %p335 = pneg %p116
        $region46: #{tpu_custom_call.1} parent=43 // pred_check_branch
          %337 = sbr.rel (%p335) target = $region48
        $region47: #{tpu_custom_call.1} parent=43 // pred_region
          %s338 = sand.u32 %s101, 1
          %s339 = scalar_lea.sflag [#allocation4], %s338
          %s340 = sand.u32 %s101, 1
          %s341 = smul.addr %s340, 24
          %s342 = scalar_lea.vmem [#allocation7], %s341
          %343 = dma.done %s339, 384
        $region48: #{tpu_custom_call.1} parent=43 // pred_fallthru
          _
      $region44: #{tpu_custom_call.1} parent=5 // pred_fallthru
        _
    $region6: #{tpu_custom_call.1} parent=1 // loop_footer
      %s21 = sadd.s32 1, %s17
    $region7: #{tpu_custom_call.1} parent=1 // loop_footer_branch
      %16 = sbr.rel target = $region3
    $region8: #{tpu_custom_call.1} parent=1 // loop_exit
      _
    %344 = vsyncpa [#allocation3], 1
    %s345 = scalar_lea.sflag [#allocation3], 1
    %346 = vsyncpa %s345, 1
    %347 = vsyncpa [#allocation6], 1
    %s348 = scalar_lea.sflag [#allocation6], 1
    %349 = vsyncpa %s348, 1
    %350 = vsyncpa [#allocation4], 1
    %s351 = scalar_lea.sflag [#allocation4], 1
    %352 = vsyncpa %s351, 1

</llo_original>
